<compile_context>
chip_gen: v6e
topology: v6e:2x2x1
jax: 0.10.0
libtpu: 0.0.40
codegen_flags: <defaults>
</compile_context>

<pallas_src>
import functools

import jax
import jax.numpy as jnp
from jax.experimental import pallas as pl
from jax.experimental.pallas import tpu as pltpu


def _dino_loss_kernel(student_ref, teacher_ref, center_ref,
                      loss_ref, new_center_ref,
                      loss_acc, center_acc,
                      *, inv_student_temp, inv_teacher_temp,
                      center_momentum, batch, block_batch, padded):
    step = pl.program_id(0)

    @pl.when(step == 0)
    def _init():
        loss_acc[...] = jnp.zeros_like(loss_acc)
        center_acc[...] = jnp.zeros_like(center_acc)

    # Stream in native dtype, do all math in f32.
    s = student_ref[...].astype(jnp.float32) * inv_student_temp       # (TB, D)
    t_raw = teacher_ref[...].astype(jnp.float32)                      # (TB, D)
    c = center_ref[...].astype(jnp.float32)                           # (1, D)

    # Teacher: softmax((teacher - center) / teacher_temp, dim=-1)
    t = (t_raw - c) * inv_teacher_temp
    t_max = jnp.max(t, axis=-1, keepdims=True)
    t_exp = jnp.exp(t - t_max)
    t_sum = jnp.sum(t_exp, axis=-1, keepdims=True)
    t_soft = t_exp * pl.reciprocal(t_sum, approx=True)                # (TB, D)

    # Student log-softmax pieces (log_p tensor never materialized).
    s_max = jnp.max(s, axis=-1, keepdims=True)
    s_shift = s - s_max
    s_lse = jnp.log(jnp.sum(jnp.exp(s_shift), axis=-1, keepdims=True))  # (TB,1)

    # CE per sample: -sum(t_soft*(s_shift - lse)) = lse - sum(t_soft*s_shift)
    per_sample = s_lse - jnp.sum(t_soft * s_shift, axis=-1, keepdims=True)

    if padded:
        rows = (step * block_batch
                + jax.lax.broadcasted_iota(jnp.int32, (block_batch, 1), 0))
        per_sample = jnp.where(rows < batch, per_sample, 0.0)

    loss_acc[...] += jnp.sum(per_sample, axis=0, keepdims=True)        # (1, 1)
    center_acc[...] += jnp.sum(t_raw, axis=0, keepdims=True)           # (1, D)

    @pl.when(step == pl.num_programs(0) - 1)
    def _finalize():
        inv_b = 1.0 / batch
        loss_ref[...] = loss_acc[...] * inv_b
        new_center_ref[...] = (
            c * center_momentum
            + center_acc[...] * ((1.0 - center_momentum) * inv_b))


def _pick_block_batch(batch, out_dim, itemsize):
    # 2 streamed inputs x 2 pipeline buffers x (TB x D x itemsize) <= ~20 MiB:
    # keeps double-buffering alive under the 48 MiB scoped-VMEM limit below on
    # all generations (incl. v7x's 64 MiB physical VMEM), with a few-MiB block
    # so the ~0.35 us/step grid overhead is amortized.
    budget = 20 * 1024 * 1024
    tb = budget // (4 * out_dim * itemsize)
    tb = max(8, (tb // 8) * 8)
    tb = min(tb, 256)
    tb = min(tb, max(8, ((batch + 7) // 8) * 8))   # never bigger than padded B
    return int(tb)


def dino_loss(student_output, teacher_output, center, *,
              teacher_temp, student_temp=0.1, center_momentum=0.9,
              update_center=True, block_batch=None):
    """Pallas DINOLoss forward. Returns (loss scalar, new_center (1, D))."""
    B, D = student_output.shape
    assert teacher_output.shape == (B, D)
    assert center.shape == (1, D)

    itemsize = jnp.dtype(student_output.dtype).itemsize
    tb = block_batch if block_batch is not None else _pick_block_batch(B, D, itemsize)
    num_blocks = pl.cdiv(B, tb)
    b_padded = num_blocks * tb
    if b_padded != B:
        pad = ((0, b_padded - B), (0, 0))
        student_output = jnp.pad(student_output, pad)
        teacher_output = jnp.pad(teacher_output, pad)

    kernel = functools.partial(
        _dino_loss_kernel,
        inv_student_temp=1.0 / float(student_temp),
        inv_teacher_temp=1.0 / float(teacher_temp),
        center_momentum=float(center_momentum),
        batch=int(B),
        block_batch=int(tb),
        padded=(b_padded != B),
    )

    loss, new_center = pl.pallas_call(
        kernel,
        out_shape=(
            jax.ShapeDtypeStruct((1, 1), jnp.float32),
            jax.ShapeDtypeStruct((1, D), jnp.float32),
        ),
        grid_spec=pltpu.PrefetchScalarGridSpec(
            num_scalar_prefetch=0,
            grid=(num_blocks,),
            in_specs=[
                pl.BlockSpec((tb, D), lambda i: (i, 0)),
                pl.BlockSpec((tb, D), lambda i: (i, 0)),
                pl.BlockSpec((1, D), lambda i: (0, 0)),    # center stays resident
            ],
            out_specs=(
                pl.BlockSpec((1, 1), lambda i: (0, 0)),
                pl.BlockSpec((1, D), lambda i: (0, 0)),
            ),
            scratch_shapes=[
                pltpu.VMEM((1, 1), jnp.float32),    # loss-sum accumulator
                pltpu.VMEM((1, D), jnp.float32),    # teacher-sum accumulator
            ],
        ),
        compiler_params=pltpu.CompilerParams(
            dimension_semantics=("arbitrary",),     # batch-chunk reduction axis
            vmem_limit_bytes=48 * 1024 * 1024,
        ),
    )(student_output, teacher_output, center.astype(jnp.float32))

    # TODO(synk): v7x megacore variant: emit per-chunk partial sums with a
    # "parallel" batch axis and do the tiny B-divide + EMA combine in JAX so
    # both TensorCores stream half the batch.
    loss_scalar = loss[0, 0]
    if update_center:
        return loss_scalar, new_center
    return loss_scalar, center


def _reference(student_output, teacher_output, center,
               teacher_temp, student_temp, center_momentum):
    s = student_output.astype(jnp.float32) / student_temp
    t = (teacher_output.astype(jnp.float32) - center) / teacher_temp
    t_soft = jax.nn.softmax(t, axis=-1)
    log_p = jax.nn.log_softmax(s, axis=-1)
    loss = jnp.mean(jnp.sum(-t_soft * log_p, axis=-1))
    batch_center = jnp.mean(teacher_output.astype(jnp.float32), axis=0, keepdims=True)
    new_center = center * center_momentum + batch_center * (1.0 - center_momentum)
    return loss, new_center


if __name__ == "__main__":
    key = jax.random.PRNGKey(0)
    k1, k2 = jax.random.split(key)

    # Small demo shapes. Batch is deliberately NOT a multiple of the block so
    # the ragged-tile masking path is exercised; block_batch=8 -> 3 grid steps.
    B, D = 20, 256
    teacher_temp = 0.04
    student_temp = 0.1
    center_momentum = 0.9

    student_output = jax.random.normal(k1, (B, D), dtype=jnp.float32)
    teacher_output = jax.random.normal(k2, (B, D), dtype=jnp.float32)
    center = jnp.zeros((1, D), dtype=jnp.float32)   # module buffer init

    loss1, center1 = dino_loss(
        student_output, teacher_output, center,
        teacher_temp=teacher_temp, student_temp=student_temp,
        center_momentum=center_momentum, update_center=True, block_batch=8)
    # Second step feeds the updated (nonzero) center back in, exercising the
    # teacher-centering path.
    loss2, center2 = dino_loss(
        teacher_output, student_output, center1,
        teacher_temp=teacher_temp, student_temp=student_temp,
        center_momentum=center_momentum, update_center=True, block_batch=8)
    jax.block_until_ready((loss1, center1, loss2, center2))

    ref_loss1, ref_center1 = _reference(student_output, teacher_output, center,
                                        teacher_temp, student_temp, center_momentum)
    ref_loss2, ref_center2 = _reference(teacher_output, student_output, ref_center1,
                                        teacher_temp, student_temp, center_momentum)

    # Loss check is relative (1e-2) to absorb the approximate EUP reciprocal in
    # the teacher softmax; the center EMA is exact arithmetic -> tight check.
    assert jnp.allclose(loss1, ref_loss1, rtol=1e-2, atol=1e-4), (loss1, ref_loss1)
    assert jnp.allclose(loss2, ref_loss2, rtol=1e-2, atol=1e-4), (loss2, ref_loss2)
    assert jnp.allclose(center1, ref_center1, rtol=1e-5, atol=1e-5)
    assert jnp.allclose(center2, ref_center2, rtol=1e-5, atol=1e-5)

    print("KERNEL_OK")
</pallas_src>

<mosaic_0001>
module attributes {stable_mosaic.version = 11 : i64} {
  func.func @_dino_loss_kernel(%arg0: i32, %arg1: memref<8x256xf32, #tpu.memory_space<vmem>>, %arg2: memref<8x256xf32, #tpu.memory_space<vmem>>, %arg3: memref<1x256xf32, #tpu.memory_space<vmem>>, %arg4: memref<1x1xf32, #tpu.memory_space<vmem>>, %arg5: memref<1x256xf32, #tpu.memory_space<vmem>>, %arg6: memref<1x1xf32, #tpu.memory_space<vmem>>, %arg7: memref<1x256xf32, #tpu.memory_space<vmem>>) attributes {dimension_semantics = [#tpu.dimension_semantics<arbitrary>], iteration_bounds = array<i64: 3>, scalar_prefetch = 0 : i64, scratch_operands = 2 : i64, tpu.core_type = #tpu.core_type<tc>, window_params = [{transform_indices = @transform_0, window_bounds = array<i64: 8, 256>}, {transform_indices = @transform_1, window_bounds = array<i64: 8, 256>}, {pipeline_mode = #tpu.pipeline_mode<synchronous>, transform_indices = @transform_2, window_bounds = array<i64: 1, 256>}, {pipeline_mode = #tpu.pipeline_mode<synchronous>, transform_indices = @transform_3, window_bounds = array<i64: 1, 1>}, {pipeline_mode = #tpu.pipeline_mode<synchronous>, transform_indices = @transform_4, window_bounds = array<i64: 1, 256>}]} {
    %c0_i32 = arith.constant 0 : i32
    %0 = arith.cmpi eq, %arg0, %c0_i32 : i32
    %1 = arith.extui %0 : i1 to i32
    %c0_i32_0 = arith.constant 0 : i32
    %2 = arith.cmpi ne, %1, %c0_i32_0 : i32
    scf.if %2 {
      %cst_24 = arith.constant 0.000000e+00 : f32
      %55 = vector.broadcast %cst_24 : f32 to vector<1x1xf32>
      %c0_25 = arith.constant 0 : index
      %c0_26 = arith.constant 0 : index
      %56 = vector.load %arg6[%c0_25, %c0_26] : memref<1x1xf32, #tpu.memory_space<vmem>>, vector<1x1xf32>
      tpu.vector_store %arg6[%c0_25, %c0_26], %55 {strides = array<i32>} : memref<1x1xf32, #tpu.memory_space<vmem>>, vector<1x1xf32>,
      %cst_27 = arith.constant 0.000000e+00 : f32
      %57 = vector.broadcast %cst_27 : f32 to vector<1x256xf32>
      %c0_28 = arith.constant 0 : index
      %c0_29 = arith.constant 0 : index
      %58 = vector.load %arg7[%c0_28, %c0_29] : memref<1x256xf32, #tpu.memory_space<vmem>>, vector<1x256xf32>
      tpu.vector_store %arg7[%c0_28, %c0_29], %57 {strides = array<i32>} : memref<1x256xf32, #tpu.memory_space<vmem>>, vector<1x256xf32>,
    } else {
    }
    %c0 = arith.constant 0 : index
    %c0_1 = arith.constant 0 : index
    %3 = vector.load %arg1[%c0, %c0_1] : memref<8x256xf32, #tpu.memory_space<vmem>>, vector<8x256xf32>
    %cst = arith.constant 1.000000e+01 : f32
    %4 = vector.broadcast %cst : f32 to vector<8x256xf32>
    %5 = arith.mulf %3, %4 : vector<8x256xf32>
    %c0_2 = arith.constant 0 : index
    %c0_3 = arith.constant 0 : index
    %6 = vector.load %arg2[%c0_2, %c0_3] : memref<8x256xf32, #tpu.memory_space<vmem>>, vector<8x256xf32>
    %c0_4 = arith.constant 0 : index
    %c0_5 = arith.constant 0 : index
    %7 = vector.load %arg3[%c0_4, %c0_5] : memref<1x256xf32, #tpu.memory_space<vmem>>, vector<1x256xf32>
    %8 = vector.broadcast %7 : vector<1x256xf32> to vector<8x256xf32>
    %9 = arith.subf %6, %8 : vector<8x256xf32>
    %cst_6 = arith.constant 2.500000e+01 : f32
    %10 = vector.broadcast %cst_6 : f32 to vector<8x256xf32>
    %11 = arith.mulf %9, %10 : vector<8x256xf32>
    %cst_7 = arith.constant dense<0xFF800000> : vector<8xf32>
    %12 = vector.multi_reduction <maximumf>, %11, %cst_7 [1] : vector<8x256xf32> to vector<8xf32>
    %13 = vector.shape_cast %12 : vector<8xf32> to vector<8x1xf32>
    %14 = vector.broadcast %13 : vector<8x1xf32> to vector<8x256xf32>
    %15 = arith.subf %11, %14 : vector<8x256xf32>
    %16 = math.exp %15 : vector<8x256xf32>
    %cst_8 = arith.constant dense<0.000000e+00> : vector<8xf32>
    %17 = vector.multi_reduction <add>, %16, %cst_8 [1] : vector<8x256xf32> to vector<8xf32>
    %18 = vector.shape_cast %17 : vector<8xf32> to vector<8x1xf32>
    %19 = tpu.reciprocal %18 {approx = true} : vector<8x1xf32> -> vector<8x1xf32>
    %20 = vector.broadcast %19 : vector<8x1xf32> to vector<8x256xf32>
    %21 = arith.mulf %16, %20 : vector<8x256xf32>
    %cst_9 = arith.constant dense<0xFF800000> : vector<8xf32>
    %22 = vector.multi_reduction <maximumf>, %5, %cst_9 [1] : vector<8x256xf32> to vector<8xf32>
    %23 = vector.shape_cast %22 : vector<8xf32> to vector<8x1xf32>
    %24 = vector.broadcast %23 : vector<8x1xf32> to vector<8x256xf32>
    %25 = arith.subf %5, %24 : vector<8x256xf32>
    %26 = math.exp %25 : vector<8x256xf32>
    %cst_10 = arith.constant dense<0.000000e+00> : vector<8xf32>
    %27 = vector.multi_reduction <add>, %26, %cst_10 [1] : vector<8x256xf32> to vector<8xf32>
    %28 = vector.shape_cast %27 : vector<8xf32> to vector<8x1xf32>
    %29 = math.log %28 : vector<8x1xf32>
    %30 = arith.mulf %21, %25 : vector<8x256xf32>
    %cst_11 = arith.constant dense<0.000000e+00> : vector<8xf32>
    %31 = vector.multi_reduction <add>, %30, %cst_11 [1] : vector<8x256xf32> to vector<8xf32>
    %32 = vector.shape_cast %31 : vector<8xf32> to vector<8x1xf32>
    %33 = arith.subf %29, %32 : vector<8x1xf32>
    %c8_i32 = arith.constant 8 : i32
    %34 = arith.muli %arg0, %c8_i32 : i32
    %35 = tpu.iota {dimensions = array<i32: 0>} : vector<8x1xi32>
    %36 = vector.broadcast %34 : i32 to vector<8x1xi32>
    %37 = arith.addi %36, %35 : vector<8x1xi32>
    %c20_i32 = arith.constant 20 : i32
    %38 = vector.broadcast %c20_i32 : i32 to vector<8x1xi32>
    %39 = arith.cmpi slt, %37, %38 : vector<8x1xi32>
    %cst_12 = arith.constant 0.000000e+00 : f32
    %40 = vector.broadcast %cst_12 : f32 to vector<8x1xf32>
    %41 = arith.select %39, %33, %40 : vector<8x1xi1>, vector<8x1xf32>
    %c0_13 = arith.constant 0 : index
    %c0_14 = arith.constant 0 : index
    %42 = vector.load %arg6[%c0_13, %c0_14] : memref<1x1xf32, #tpu.memory_space<vmem>>, vector<1x1xf32>
    %cst_15 = arith.constant dense<0.000000e+00> : vector<1xf32>
    %43 = vector.multi_reduction <add>, %41, %cst_15 [0] : vector<8x1xf32> to vector<1xf32>
    %44 = vector.shape_cast %43 : vector<1xf32> to vector<1x1xf32>
    %45 = arith.addf %42, %44 : vector<1x1xf32>
    %c0_16 = arith.constant 0 : index
    %c0_17 = arith.constant 0 : index
    %46 = vector.load %arg6[%c0_16, %c0_17] : memref<1x1xf32, #tpu.memory_space<vmem>>, vector<1x1xf32>
    tpu.vector_store %arg6[%c0_16, %c0_17], %45 {strides = array<i32>} : memref<1x1xf32, #tpu.memory_space<vmem>>, vector<1x1xf32>,
    %c0_18 = arith.constant 0 : index
    %c0_19 = arith.constant 0 : index
    %47 = vector.load %arg7[%c0_18, %c0_19] : memref<1x256xf32, #tpu.memory_space<vmem>>, vector<1x256xf32>
    %cst_20 = arith.constant dense<0.000000e+00> : vector<256xf32>
    %48 = vector.multi_reduction <add>, %6, %cst_20 [0] : vector<8x256xf32> to vector<256xf32>
    %49 = vector.shape_cast %48 : vector<256xf32> to vector<1x256xf32>
    %50 = arith.addf %47, %49 : vector<1x256xf32>
    %c0_21 = arith.constant 0 : index
    %c0_22 = arith.constant 0 : index
    %51 = vector.load %arg7[%c0_21, %c0_22] : memref<1x256xf32, #tpu.memory_space<vmem>>, vector<1x256xf32>
    tpu.vector_store %arg7[%c0_21, %c0_22], %50 {strides = array<i32>} : memref<1x256xf32, #tpu.memory_space<vmem>>, vector<1x256xf32>,
    %c2_i32 = arith.constant 2 : i32
    %52 = arith.cmpi eq, %arg0, %c2_i32 : i32
    %53 = arith.extui %52 : i1 to i32
    %c0_i32_23 = arith.constant 0 : i32
    %54 = arith.cmpi ne, %53, %c0_i32_23 : i32
    scf.if %54 {
      %c0_24 = arith.constant 0 : index
      %c0_25 = arith.constant 0 : index
      %55 = vector.load %arg6[%c0_24, %c0_25] : memref<1x1xf32, #tpu.memory_space<vmem>>, vector<1x1xf32>
      %cst_26 = arith.constant 5.000000e-02 : f32
      %56 = vector.broadcast %cst_26 : f32 to vector<1x1xf32>
      %57 = arith.mulf %55, %56 : vector<1x1xf32>
      %c0_27 = arith.constant 0 : index
      %c0_28 = arith.constant 0 : index
      %58 = vector.load %arg4[%c0_27, %c0_28] : memref<1x1xf32, #tpu.memory_space<vmem>>, vector<1x1xf32>
      tpu.vector_store %arg4[%c0_27, %c0_28], %57 {strides = array<i32>} : memref<1x1xf32, #tpu.memory_space<vmem>>, vector<1x1xf32>,
      %cst_29 = arith.constant 0.899999976 : f32
      %59 = vector.broadcast %cst_29 : f32 to vector<1x256xf32>
      %60 = arith.mulf %7, %59 : vector<1x256xf32>
      %c0_30 = arith.constant 0 : index
      %c0_31 = arith.constant 0 : index
      %61 = vector.load %arg7[%c0_30, %c0_31] : memref<1x256xf32, #tpu.memory_space<vmem>>, vector<1x256xf32>
      %cst_32 = arith.constant 5.000000e-03 : f32
      %62 = vector.broadcast %cst_32 : f32 to vector<1x256xf32>
      %63 = arith.mulf %61, %62 : vector<1x256xf32>
      %64 = arith.addf %60, %63 : vector<1x256xf32>
      %c0_33 = arith.constant 0 : index
      %c0_34 = arith.constant 0 : index
      %65 = vector.load %arg5[%c0_33, %c0_34] : memref<1x256xf32, #tpu.memory_space<vmem>>, vector<1x256xf32>
      tpu.vector_store %arg5[%c0_33, %c0_34], %64 {strides = array<i32>} : memref<1x256xf32, #tpu.memory_space<vmem>>, vector<1x256xf32>,
    } else {
    }
    return
  }
  func.func @transform_0(%arg0: i32) -> (i32, i32) {
    %c0_i32 = arith.constant 0 : i32
    %c0_i32_0 = arith.constant 0 : i32
    return %arg0, %c0_i32 : i32, i32
  }
  func.func @transform_1(%arg0: i32) -> (i32, i32) {
    %c0_i32 = arith.constant 0 : i32
    %c0_i32_0 = arith.constant 0 : i32
    return %arg0, %c0_i32 : i32, i32
  }
  func.func @transform_2(%arg0: i32) -> (i32, i32) {
    %c0_i32 = arith.constant 0 : i32
    %c0_i32_0 = arith.constant 0 : i32
    %c0_i32_1 = arith.constant 0 : i32
    return %c0_i32, %c0_i32_0 : i32, i32
  }
  func.func @transform_3(%arg0: i32) -> (i32, i32) {
    %c0_i32 = arith.constant 0 : i32
    %c0_i32_0 = arith.constant 0 : i32
    %c0_i32_1 = arith.constant 0 : i32
    return %c0_i32, %c0_i32_0 : i32, i32
  }
  func.func @transform_4(%arg0: i32) -> (i32, i32) {
    %c0_i32 = arith.constant 0 : i32
    %c0_i32_0 = arith.constant 0 : i32
    %c0_i32_1 = arith.constant 0 : i32
    return %c0_i32, %c0_i32_0 : i32, i32
  }
}

</mosaic_0001>

<llo_original>
// kernel: tpu_custom_call.1
$region0: #{tpu_custom_call.1}
  #allocation0 [shape = 'u32[]', space=smem, size = 0x4, offset = 0x4, fixed_abs, tag = 'smem constant byte address 0x4 - core index']
  #allocation1 [shape = 'u32[144,128]{1,0:T(1,128)}', space=vmem, size = 0x12000, scoped, tag = 'internal scratch']
  #allocation2 [shape = 'f32[1,1]{1,0:T(1,128)}', space=vmem, size = 0x200, scoped, tag = 'scratch operand']
  #allocation3 [shape = 'f32[1,256]{1,0:T(1,128)}', space=vmem, size = 0x400, scoped, tag = 'scratch operand']
  %s0 = inlined_call_operand.hbm [shape: f32[24,256], index: 0, kind: input, shape index: {}]
  %s1 = inlined_call_operand.hbm [shape: f32[24,256], index: 1, kind: input, shape index: {}]
  %s2 = inlined_call_operand.vmem [shape: f32[1,256], index: 2, kind: input, shape index: {}]
  %s3 = inlined_call_operand.hbm [shape: f32[1,1], index: 3, kind: output, shape index: {0}]
  %s4 = inlined_call_operand.hbm [shape: f32[1,256], index: 4, kind: output, shape index: {1}]
  %5 = xla_tuple %s3, %s4
  %s6 = sld [smem:[#allocation0]]
  $region69: #{tpu_custom_call.1} parent=0
    _
  %s8 = ssub.s32 1, %s6
  %s9 = scalar_select 0, %s8, %s6
  $region1: #{tpu_custom_call.1} parent=0
    #allocation4 [shape = 'u8[16384]{0}', space=vmem, size = 0x4000, scoped, tag = 'input window, operand 0']
    #allocation5 [shape = 's32[2]{0}', space=sflag, size = 0x8, scoped, tag = 'scoped memory for tpu_custom_call.1']
    #allocation6 [shape = 's32[2]{0}', space=sflag, size = 0x8, scoped, tag = 'scoped memory for tpu_custom_call.1']
    #allocation7 [shape = 'u8[16384]{0}', space=vmem, size = 0x4000, scoped, tag = 'input window, operand 1']
    #allocation8 [shape = 's32[2]{0}', space=sflag, size = 0x8, scoped, tag = 'scoped memory for tpu_custom_call.1']
    #allocation9 [shape = 'u8[512]{0}', space=vmem, size = 0x400, scoped, tag = 'output window, operand 0, single buffered']
    #allocation10 [shape = 'u8[1024]{0}', space=vmem, size = 0x400, scoped, tag = 'output window, operand 1, single buffered']
    #allocation11 [shape = 's32[1]{0}', space=sflag, size = 0x4, scoped, tag = 'scoped memory for tpu_custom_call.1']
    %10 = vsyncpa [#allocation5], 0
    %s11 = scalar_lea.sflag [#allocation5], 1
    %12 = vsyncpa %s11, 0
    %13 = vsyncpa [#allocation8], 0
    %s14 = scalar_lea.sflag [#allocation8], 1
    %15 = vsyncpa %s14, 0
    %16 = vsyncpa [#allocation6], 0
    %17 = vsyncpa [#allocation11], 0
    loop: start=0, step=1, limit=5
    $region2: #{tpu_custom_call.1} parent=1 // loop_pre_header
      _
    $region3: #{tpu_custom_call.1} parent=1 // loop_header
      %s19 = sphi 0, %s23
      %p20 = scmp.ge.s32.totalorder %s19, 5
      %s29 = sphi 0, %s31
      %s32 = sphi 0, %s29
      %s33 = sphi 0, %s32
      %s49 = sphi 0, %s33
      %s55 = sphi 0, %s57
      %s58 = sphi 0, %s55
      %s59 = sphi 0, %s58
      %s75 = sphi 0, %s59
      %s79 = sphi 0, %s79
      %s81 = sphi 0, %s79
      %s82 = sphi 0, %s81
      %s96 = sphi 0, %s82
      %s100 = sphi 0, %s100
      %s102 = sphi 0, %s100
      %s103 = sphi 0, %s102
      %s117 = sphi 0, %s103
      %s121 = sphi 0, %s121
      %s123 = sphi 0, %s121
      %s124 = sphi 0, %s123
      %s138 = sphi 0, %s124
    $region4: #{tpu_custom_call.1} parent=1 // loop_header_branch
      %22 = sbr.rel (%p20) target = $region8
    $region5: #{tpu_custom_call.1} parent=1 // loop_body
      %s24 = ssub.s32 %s19, 1
      %s25 = ssub.s32 %s19, 2
      %s26 = sadd.s32 %s19, 1
      %s27 = ssub.s32 %s19, %s26
      %p28 = scmp.eq.s32.totalorder %s27, 0
      %s30 = sadd.s32 %s29, 1
      %s31 = scalar_select %p28, %s29, %s30
      %p34 = pneg %p28
      %p35 = scmp.eq.s32.totalorder %s19, 2
      %p36 = por %p34, %p35
      %p37 = scmp.ne.s32.totalorder %s29, %s32
      %p38 = scmp.eq.s32.totalorder %s19, 0
      %p39 = por %p37, %p38
      %p40 = scmp.ne.s32.totalorder %s29, %s32
      %p41 = scmp.eq.s32.totalorder %s24, 2
      %p42 = por %p40, %p41
      %p43 = scmp.ne.s32.totalorder %s32, %s33
      %p44 = scmp.eq.s32.totalorder %s24, 0
      %p45 = por %p43, %p44
      %p46 = scmp.ne.s32.totalorder %s32, %s33
      %p47 = scmp.eq.s32.totalorder %s25, 2
      %p48 = por %p46, %p47
      %p50 = scmp.ne.s32.totalorder %s33, %s49
      %p51 = scmp.eq.s32.totalorder %s25, 0
      %p52 = por %p50, %p51
      %s53 = ssub.s32 %s19, %s26
      %p54 = scmp.eq.s32.totalorder %s53, 0
      %s56 = sadd.s32 %s55, 1
      %s57 = scalar_select %p54, %s55, %s56
      %p60 = pneg %p54
      %p61 = scmp.eq.s32.totalorder %s19, 2
      %p62 = por %p60, %p61
      %p63 = scmp.ne.s32.totalorder %s55, %s58
      %p64 = scmp.eq.s32.totalorder %s19, 0
      %p65 = por %p63, %p64
      %p66 = scmp.ne.s32.totalorder %s55, %s58
      %p67 = scmp.eq.s32.totalorder %s24, 2
      %p68 = por %p66, %p67
      %p69 = scmp.ne.s32.totalorder %s58, %s59
      %p70 = scmp.eq.s32.totalorder %s24, 0
      %p71 = por %p69, %p70
      %p72 = scmp.ne.s32.totalorder %s58, %s59
      %p73 = scmp.eq.s32.totalorder %s25, 2
      %p74 = por %p72, %p73
      %p76 = scmp.ne.s32.totalorder %s59, %s75
      %p77 = scmp.eq.s32.totalorder %s25, 0
      %p78 = por %p76, %p77
      %s80 = sadd.s32 %s79, 1
      %p83 = scmp.eq.s32.totalorder %s19, 2
      %p84 = scmp.ne.s32.totalorder %s79, %s81
      %p85 = scmp.eq.s32.totalorder %s19, 0
      %p86 = por %p84, %p85
      %p87 = scmp.ne.s32.totalorder %s79, %s81
      %p88 = scmp.eq.s32.totalorder %s24, 2
      %p89 = por %p87, %p88
      %p90 = scmp.ne.s32.totalorder %s81, %s82
      %p91 = scmp.eq.s32.totalorder %s24, 0
      %p92 = por %p90, %p91
      %p93 = scmp.ne.s32.totalorder %s81, %s82
      %p94 = scmp.eq.s32.totalorder %s25, 2
      %p95 = por %p93, %p94
      %p97 = scmp.ne.s32.totalorder %s82, %s96
      %p98 = scmp.eq.s32.totalorder %s25, 0
      %p99 = por %p97, %p98
      %s101 = sadd.s32 %s100, 1
      %p104 = scmp.eq.s32.totalorder %s19, 2
      %p105 = scmp.ne.s32.totalorder %s100, %s102
      %p106 = scmp.eq.s32.totalorder %s19, 0
      %p107 = por %p105, %p106
      %p108 = scmp.ne.s32.totalorder %s100, %s102
      %p109 = scmp.eq.s32.totalorder %s24, 2
      %p110 = por %p108, %p109
      %p111 = scmp.ne.s32.totalorder %s102, %s103
      %p112 = scmp.eq.s32.totalorder %s24, 0
      %p113 = por %p111, %p112
      %p114 = scmp.ne.s32.totalorder %s102, %s103
      %p115 = scmp.eq.s32.totalorder %s25, 2
      %p116 = por %p114, %p115
      %p118 = scmp.ne.s32.totalorder %s103, %s117
      %p119 = scmp.eq.s32.totalorder %s25, 0
      %p120 = por %p118, %p119
      %s122 = sadd.s32 %s121, 1
      %p125 = scmp.eq.s32.totalorder %s19, 2
      %p126 = scmp.ne.s32.totalorder %s121, %s123
      %p127 = scmp.eq.s32.totalorder %s19, 0
      %p128 = por %p126, %p127
      %p129 = scmp.ne.s32.totalorder %s121, %s123
      %p130 = scmp.eq.s32.totalorder %s24, 2
      %p131 = por %p129, %p130
      %p132 = scmp.ne.s32.totalorder %s123, %s124
      %p133 = scmp.eq.s32.totalorder %s24, 0
      %p134 = por %p132, %p133
      %p135 = scmp.ne.s32.totalorder %s123, %s124
      %p136 = scmp.eq.s32.totalorder %s25, 2
      %p137 = por %p135, %p136
      %p139 = scmp.ne.s32.totalorder %s124, %s138
      %p140 = scmp.eq.s32.totalorder %s25, 0
      %p141 = por %p139, %p140
      %p142 = scmp.le.s32.totalorder 1, %s19
      %p143 = scmp.lt.s32.totalorder %s19, 4
      %p144 = pnand %p142, %p143
      %p145 = pneg %p144
      // Predicated region
      $region9: #{tpu_custom_call.1} parent=5 // pred_check
        _
      $region10: #{tpu_custom_call.1} parent=5 // pred_check_branch
        %147 = sbr.rel (%p144) target = $region12
      $region11: #{tpu_custom_call.1} parent=5 // pred_region
        %s148 = ssub.s32 %s19, 1
        // Predicated region
        $region13: #{tpu_custom_call.1} parent=11 // pred_check
          %p149 = pneg %p92
        $region14: #{tpu_custom_call.1} parent=11 // pred_check_branch
          %151 = sbr.rel (%p149) target = $region16
        $region15: #{tpu_custom_call.1} parent=11 // pred_region
          _
        $region16: #{tpu_custom_call.1} parent=11 // pred_fallthru
          _
      $region12: #{tpu_custom_call.1} parent=5 // pred_fallthru
        _
      %p152 = scmp.lt.s32.totalorder %s19, 3
      // Predicated region
      $region17: #{tpu_custom_call.1} parent=5 // pred_check
        %p153 = pneg %p152
      $region18: #{tpu_custom_call.1} parent=5 // pred_check_branch
        %155 = sbr.rel (%p153) target = $region20
      $region19: #{tpu_custom_call.1} parent=5 // pred_region
        // Predicated region
        $region21: #{tpu_custom_call.1} parent=19 // pred_check
          %p156 = pneg %p39
        $region22: #{tpu_custom_call.1} parent=19 // pred_check_branch
          %158 = sbr.rel (%p156) target = $region24
        $region23: #{tpu_custom_call.1} parent=19 // pred_region
          %s159 = sand.u32 %s29, 1
          %s160 = scalar_lea.sflag [#allocation5], %s159
          %s161 = sand.u32 %s29, 1
          %s162 = smul.addr %s161, 16
          %s163 = scalar_lea.vmem [#allocation4], %s162
          %s165 = ssub.s32 256, 256
          %166 = vsyncadd %s160, %s165
          %s167 = smul.addr %s19, 2
          %s168 = smul.addr %s167, 128
          %s169 = scalar_lea.hbm %s0, %s168
          %s171 = sshll.u32 %s163, 4
          %s172 = int_to_ptr.vmem [resolvable:$true] %s171
          %174 = dma.hbm_to_vmem [thread:$0]  %s169, 256, %s172, %s160
        $region24: #{tpu_custom_call.1} parent=19 // pred_fallthru
          _
        // Predicated region
        $region25: #{tpu_custom_call.1} parent=19 // pred_check
          %p175 = pneg %p65
        $region26: #{tpu_custom_call.1} parent=19 // pred_check_branch
          %177 = sbr.rel (%p175) target = $region28
        $region27: #{tpu_custom_call.1} parent=19 // pred_region
          %s178 = sand.u32 %s55, 1
          %s179 = scalar_lea.sflag [#allocation8], %s178
          %s180 = sand.u32 %s55, 1
          %s181 = smul.addr %s180, 16
          %s182 = scalar_lea.vmem [#allocation7], %s181
          %s184 = ssub.s32 256, 256
          %185 = vsyncadd %s179, %s184
          %s186 = smul.addr %s19, 2
          %s187 = smul.addr %s186, 128
          %s188 = scalar_lea.hbm %s1, %s187
          %s190 = sshll.u32 %s182, 4
          %s191 = int_to_ptr.vmem [resolvable:$true] %s190
          %193 = dma.hbm_to_vmem [thread:$0]  %s188, 256, %s191, %s179
        $region28: #{tpu_custom_call.1} parent=19 // pred_fallthru
          _
      $region20: #{tpu_custom_call.1} parent=5 // pred_fallthru
        _
      %p194 = scmp.le.s32.totalorder 1, %s19
      %p195 = scmp.lt.s32.totalorder %s19, 4
      %p196 = pnand %p194, %p195
      %p197 = pneg %p196
      // Predicated region
      $region29: #{tpu_custom_call.1} parent=5 // pred_check
        _
      $region30: #{tpu_custom_call.1} parent=5 // pred_check_branch
        %199 = sbr.rel (%p196) target = $region32
      $region31: #{tpu_custom_call.1} parent=5 // pred_region
        %s200 = ssub.s32 %s19, 1
        %s201 = sand.u32 %s32, 1
        %s202 = scalar_lea.sflag [#allocation5], %s201
        %s203 = sand.u32 %s32, 1
        %s204 = smul.addr %s203, 16
        %s205 = scalar_lea.vmem [#allocation4], %s204
        // Predicated region
        $region33: #{tpu_custom_call.1} parent=31 // pred_check
          %p206 = pneg %p45
        $region34: #{tpu_custom_call.1} parent=31 // pred_check_branch
          %208 = sbr.rel (%p206) target = $region36
        $region35: #{tpu_custom_call.1} parent=31 // pred_region
          %209 = dma.done %s202, 256
        $region36: #{tpu_custom_call.1} parent=31 // pred_fallthru
          _
        %s210 = sand.u32 %s58, 1
        %s211 = scalar_lea.sflag [#allocation8], %s210
        %s212 = sand.u32 %s58, 1
        %s213 = smul.addr %s212, 16
        %s214 = scalar_lea.vmem [#allocation7], %s213
        // Predicated region
        $region37: #{tpu_custom_call.1} parent=31 // pred_check
          %p215 = pneg %p71
        $region38: #{tpu_custom_call.1} parent=31 // pred_check_branch
          %217 = sbr.rel (%p215) target = $region40
        $region39: #{tpu_custom_call.1} parent=31 // pred_region
          %218 = dma.done %s211, 256
        $region40: #{tpu_custom_call.1} parent=31 // pred_fallthru
          _
        %s219 = sand.u32 %s32, 1
        %s220 = scalar_lea.sflag [#allocation5], %s219
        %s221 = sand.u32 %s32, 1
        %s222 = smul.addr %s221, 16
        %s223 = scalar_lea.vmem [#allocation4], %s222
        %p224 = pneg %p45
        %p225 = pneg %p42
        %s226 = sand.u32 %s58, 1
        %s227 = scalar_lea.sflag [#allocation8], %s226
        %s228 = sand.u32 %s58, 1
        %s229 = smul.addr %s228, 16
        %s230 = scalar_lea.vmem [#allocation7], %s229
        %p231 = pneg %p71
        %p232 = pneg %p68
        %p233 = pneg %p92
        %p234 = pneg %p89
        %p235 = pneg %p113
        %p236 = pneg %p110
        %p237 = pneg %p134
        %p238 = pneg %p131
        %p239 = scmp.eq.s32.totalorder %s24, 0
        // Predicated region
        $region41: #{tpu_custom_call.1} parent=31 // pred_check
          %p240 = pneg %p239
        $region42: #{tpu_custom_call.1} parent=31 // pred_check_branch
          %242 = sbr.rel (%p240) target = $region44
        $region43: #{tpu_custom_call.1} parent=31 // pred_region
          %vm243 = vcmask 0
          %244 = vst.msk [vmem:[#allocation2] sm:$0x1] %vm243, 0.0
          %v245 = vlaneseq
          %vm246 = vcmp.ge.s32.totalorder %v245, 0
          %vm247 = vcmp.lt.s32.totalorder %v245, 256
          %vm248 = vmand %vm246, %vm247
          %249 = vst.msk [vmem:[#allocation3] sm:$0x3] %vm248, 0.0
        $region44: #{tpu_custom_call.1} parent=31 // pred_fallthru
          _
        %v250 = vld [vmem:[%s205] sm:$0xff]
        %v251 = vld [vmem:[%s205 + $0x8] sm:$0xff]
        %v252 = vmul.f32 %v250, 10.0
        %v253 = vmul.f32 %v251, 10.0
        %v254 = vld [vmem:[%s214] sm:$0xff]
        %v255 = vld [vmem:[%s214 + $0x8] sm:$0xff]
        %v256 = vld [vmem:[%s2] sm:$0x3]
        %v258 = vlaneseq
        %v259 = vshrl.u32 %v258, 7
        %v260 = vsub.s32 0, %v259
        %v261 = vrot.slane %v256, %v260
        %v262 = vlaneseq
        %v263 = vshrl.u32 %v262, 7
        %v264 = vsub.s32 1, %v263
        %v265 = vrot.slane %v256, %v264
        %v268 = vsub.f32 %v254, %v261
        %v269 = vsub.f32 %v255, %v265
        %v270 = vmul.f32 %v268, 25.0
        %v271 = vmul.f32 %v269, 25.0
        %v272 = vmax.f32 %v270, %v271
        %273 = vmax.xlane.f32.xlu0 %v272
        %v274 = vpop.xlane.xlu0 %273
        %v275 = vsub.f32 %v270, %v274
        %v276 = vsub.f32 %v271, %v274
        %v277 = vmul.f32 %v275, 1.442695
        %v278 = vpow.pop %v277
        %v279 = vmul.f32 %v276, 1.442695
        %v280 = vpow.pop %v279
        %v281 = vadd.f32 %v278, %v280
        %282 = vadd.xlane.f32.xlu0 %v281
        %v283 = vpop.xlane.xlu0 %282
        %v284 = vrcp.pop %v283
        %v285 = vmul.f32 %v278, %v284
        %v286 = vmul.f32 %v280, %v284
        %v287 = vmax.f32 %v252, %v253
        %288 = vmax.xlane.f32.xlu0 %v287
        %v289 = vpop.xlane.xlu0 %288
        %v290 = vsub.f32 %v252, %v289
        %v291 = vsub.f32 %v253, %v289
        %v292 = vmul.f32 %v290, 1.442695
        %v293 = vpow.pop %v292
        %v294 = vmul.f32 %v291, 1.442695
        %v295 = vpow.pop %v294
        %v296 = vadd.f32 %v293, %v295
        %297 = vadd.xlane.f32.xlu0 %v296
        %v298 = vpop.xlane.xlu0 %297
        %v299 = vlog2.pop %v298
        %v300 = vmul.f32 %v299, 0.6931472
        %v301 = vmul.f32 %v285, %v290
        %v302 = vmul.f32 %v286, %v291
        %v303 = vadd.f32 %v301, %v302
        %304 = vadd.xlane.f32.xlu0 %v303
        %v305 = vpop.xlane.xlu0 %304
        %v306 = vsub.f32 %v300, %v305
        %s307 = smul.u32 %s24, 8
        %v308 = vlaneseq
        %v309 = vshrl.u32 %v308, 7
        %v310 = vstv %s307
        %v311 = vadd.s32 %v310, %v309
        %vm312 = vcmp.lt.s32.totalorder %v311, 20
        %v313 = vsel %vm312, %v306, 0.0
        %v314 = vld [vmem:[#allocation2] sm:$0x1]
        %v315 = vrot.slane %v313, 4
        %v316 = vadd.f32 %v313, %v315
        %v317 = vrot.slane %v316, 2
        %v318 = vadd.f32 %v316, %v317
        %v319 = vrot.slane %v318, 1
        %v320 = vadd.f32 %v318, %v319
        %v321 = vadd.f32 %v314, %v320
        %vm322 = vcmask 0
        %323 = vst.msk [vmem:[#allocation2] sm:$0x1] %vm322, %v321
        %v324 = vld [vmem:[#allocation3] sm:$0x3]
        %v325 = vrot.slane %v254, 4
        %v326 = vadd.f32 %v254, %v325
        %v327 = vrot.slane %v326, 2
        %v328 = vadd.f32 %v326, %v327
        %v329 = vrot.slane %v328, 1
        %v330 = vadd.f32 %v328, %v329
        %v331 = vrot.slane %v255, 4
        %v332 = vadd.f32 %v255, %v331
        %v333 = vrot.slane %v332, 2
        %v334 = vadd.f32 %v332, %v333
        %v335 = vrot.slane %v334, 1
        %v336 = vadd.f32 %v334, %v335
        %v339 = vcombine.low %v330, %v336
        %v341 = vunpack.c.l.s4 1966171168
        %v342 = vunpack.c.0.s8 %v341
        %v343 = vlaneseq
        %v344 = vshrl.u32 %v343, 7
        %v345 = vsub.s32 %v342, %v344
        %v346 = vrot.slane %v339, %v345
        %v348 = vunpack.c.l.s4 1966171168
        %v349 = vunpack.c.0.s8 %v348
        %v350 = vlaneseq
        %v351 = vshrl.u32 %v350, 7
        %v352 = vsub.s32 %v349, %v351
        %v353 = vrot.slane %v346, %v352
        %v355 = vadd.f32 %v324, %v353
        %v356 = vlaneseq
        %vm357 = vcmp.ge.s32.totalorder %v356, 0
        %vm358 = vcmp.lt.s32.totalorder %v356, 256
        %vm359 = vmand %vm357, %vm358
        %360 = vst.msk [vmem:[#allocation3] sm:$0x3] %vm359, %v355
        %p361 = scmp.eq.s32.totalorder %s24, 2
        // Predicated region
        $region45: #{tpu_custom_call.1} parent=31 // pred_check
          %p362 = pneg %p361
        $region46: #{tpu_custom_call.1} parent=31 // pred_check_branch
          %364 = sbr.rel (%p362) target = $region48
        $region47: #{tpu_custom_call.1} parent=31 // pred_region
          %v365 = vld [vmem:[#allocation2] sm:$0x1]
          %v366 = vmul.f32 %v365, 0.05
          %367 = vst.msk [vmem:[#allocation9] sm:$0x1] %vm322, %v366
          %v368 = vmul.f32 %v256, 0.9
          %v369 = vld [vmem:[#allocation3] sm:$0x3]
          %v370 = vmul.f32 %v369, 0.005
          %v371 = vadd.f32 %v368, %v370
          %372 = vst.msk [vmem:[#allocation10] sm:$0x3] %vm359, %v371
        $region48: #{tpu_custom_call.1} parent=31 // pred_fallthru
          _
        // Predicated region
        $region49: #{tpu_custom_call.1} parent=31 // pred_check
          %p373 = pneg %p110
        $region50: #{tpu_custom_call.1} parent=31 // pred_check_branch
          %375 = sbr.rel (%p373) target = $region52
        $region51: #{tpu_custom_call.1} parent=31 // pred_region
          %s377 = ssub.s32 16, 16
          %378 = vsyncadd [#allocation6], %s377
          %s380 = sshll.u32 [#allocation9], 4
          %s381 = int_to_ptr.vmem [resolvable:$true] %s380
          %383 = dma.vmem_to_hbm [thread:$0]  %s381, 16, %s3, [#allocation6]
        $region52: #{tpu_custom_call.1} parent=31 // pred_fallthru
          _
        // Predicated region
        $region53: #{tpu_custom_call.1} parent=31 // pred_check
          %p384 = pneg %p131
        $region54: #{tpu_custom_call.1} parent=31 // pred_check_branch
          %386 = sbr.rel (%p384) target = $region56
        $region55: #{tpu_custom_call.1} parent=31 // pred_region
          %s388 = ssub.s32 32, 32
          %389 = vsyncadd [#allocation11], %s388
          %s391 = sshll.u32 [#allocation10], 4
          %s392 = int_to_ptr.vmem [resolvable:$true] %s391
          %394 = dma.vmem_to_hbm [thread:$0]  %s392, 32, %s4, [#allocation11]
        $region56: #{tpu_custom_call.1} parent=31 // pred_fallthru
          _
        // Predicated region
        $region57: #{tpu_custom_call.1} parent=31 // pred_check
          %p395 = pneg %p110
        $region58: #{tpu_custom_call.1} parent=31 // pred_check_branch
          %397 = sbr.rel (%p395) target = $region60
        $region59: #{tpu_custom_call.1} parent=31 // pred_region
          %398 = dma.done [#allocation6], 16
        $region60: #{tpu_custom_call.1} parent=31 // pred_fallthru
          _
        // Predicated region
        $region61: #{tpu_custom_call.1} parent=31 // pred_check
          %p399 = pneg %p131
        $region62: #{tpu_custom_call.1} parent=31 // pred_check_branch
          %401 = sbr.rel (%p399) target = $region64
        $region63: #{tpu_custom_call.1} parent=31 // pred_region
          %402 = dma.done [#allocation11], 32
        $region64: #{tpu_custom_call.1} parent=31 // pred_fallthru
          _
      $region32: #{tpu_custom_call.1} parent=5 // pred_fallthru
        _
      %p403 = scmp.le.s32.totalorder 2, %s19
      // Predicated region
      $region65: #{tpu_custom_call.1} parent=5 // pred_check
        %p404 = pneg %p403
      $region66: #{tpu_custom_call.1} parent=5 // pred_check_branch
        %406 = sbr.rel (%p404) target = $region68
      $region67: #{tpu_custom_call.1} parent=5 // pred_region
        %s407 = ssub.s32 %s19, 2
      $region68: #{tpu_custom_call.1} parent=5 // pred_fallthru
        _
    $region6: #{tpu_custom_call.1} parent=1 // loop_footer
      %s23 = sadd.s32 1, %s19
    $region7: #{tpu_custom_call.1} parent=1 // loop_footer_branch
      %18 = sbr.rel target = $region3
    $region8: #{tpu_custom_call.1} parent=1 // loop_exit
      _
    %408 = vsyncpa [#allocation5], 1
    %s409 = scalar_lea.sflag [#allocation5], 1
    %410 = vsyncpa %s409, 1
    %411 = vsyncpa [#allocation8], 1
    %s412 = scalar_lea.sflag [#allocation8], 1
    %413 = vsyncpa %s412, 1
    %414 = vsyncpa [#allocation6], 1
    %s415 = scalar_lea.sflag [#allocation6], 1
    %416 = vsyncpa %s415, 1
    %417 = vsyncpa [#allocation11], 1

</llo_original>
